<compile_context>
chip_gen: v7x
topology: tpu7x:2x2x1
jax: 0.10.0
libtpu: 0.0.40
codegen_flags: <defaults>
</compile_context>

<pallas_src>
import functools

import jax
import jax.numpy as jnp
from jax.experimental import pallas as pl
from jax.experimental.pallas import tpu as pltpu


def _ce_acc_kernel(logits_ref, labels_ref, sum_nll_ref, sum_correct_ref, *,
                   n_rows):
    i = pl.program_id(0)

    @pl.when(i == 0)
    def _init():
        sum_nll_ref[...] = jnp.zeros_like(sum_nll_ref)
        sum_correct_ref[...] = jnp.zeros_like(sum_correct_ref)

    logits = logits_ref[...].astype(jnp.float32)        # (TN, C)
    labels = labels_ref[...]                            # (TN, 1) int32
    tn, c = logits.shape

    # Global row index -> mask for the (possibly partial) last tile.
    row = i * tn + jax.lax.broadcasted_iota(jnp.int32, (tn, 1), 0)
    valid = row < n_rows                                 # (TN, 1) bool

    col = jax.lax.broadcasted_iota(jnp.int32, (tn, c), 1)

    # numerically-stable logsumexp (no full log-softmax materialization)
    m = jnp.max(logits, axis=-1, keepdims=True)                              # (TN,1)
    lse = m + jnp.log(jnp.sum(jnp.exp(logits - m), axis=-1, keepdims=True))  # (TN,1)

    # gather the label logit with a masked sum (replaces one-hot * logp)
    label_logit = jnp.sum(jnp.where(col == labels, logits, 0.0),
                          axis=-1, keepdims=True)                            # (TN,1)
    nll = lse - label_logit                                                  # (TN,1)

    # accuracy: first-index argmax to match torch.argmax tie-breaking
    argmax_idx = jnp.min(jnp.where(logits == m, col, jnp.int32(c)),
                         axis=-1, keepdims=True)                             # (TN,1)
    correct = argmax_idx == labels                                           # (TN,1)

    # Selects (not multiplies): garbage/NaN in out-of-bounds rows is dropped.
    sum_nll_ref[...] += jnp.sum(jnp.where(valid, nll, 0.0), keepdims=True)
    sum_correct_ref[...] += jnp.sum(jnp.where(valid & correct, 1.0, 0.0),
                                    keepdims=True)


def _pick_tile_n(n, c, itemsize):
    # One logits tile (double-buffered by Pallas) stays small enough for
    # v7x's 64 MiB VMEM (scoped default ~32 MiB); also fine on v5e/v6e.
    budget_bytes = 4 * 1024 * 1024
    tn = budget_bytes // max(1, c * itemsize)
    tn = max(8, min(1024, (tn // 8) * 8))
    n_pad8 = ((n + 7) // 8) * 8
    return min(tn, n_pad8)


def _ce_acc_pallas(y_pred, y_true, tile_n=None):
    n, c = y_pred.shape
    itemsize = jnp.dtype(y_pred.dtype).itemsize
    tn = tile_n if tile_n is not None else _pick_tile_n(n, c, itemsize)
    tn = max(8, (int(tn) // 8) * 8)

    labels = y_true.astype(jnp.int32).reshape(n, 1)
    num_tiles = pl.cdiv(n, tn)

    kernel = functools.partial(_ce_acc_kernel, n_rows=n)

    sum_nll, sum_correct = pl.pallas_call(
        kernel,
        out_shape=(jax.ShapeDtypeStruct((1, 1), jnp.float32),
                   jax.ShapeDtypeStruct((1, 1), jnp.float32)),
        grid=(num_tiles,),
        in_specs=[
            pl.BlockSpec((tn, c), lambda i: (i, 0)),   # logits, native dtype
            pl.BlockSpec((tn, 1), lambda i: (i, 0)),   # labels
        ],
        out_specs=(
            pl.BlockSpec((1, 1), lambda i: (0, 0)),    # resident accumulator
            pl.BlockSpec((1, 1), lambda i: (0, 0)),
        ),
        compiler_params=pltpu.CompilerParams(
            dimension_semantics=("arbitrary",)),       # axis carries accumulator
    )(y_pred, labels)

    inv_n = jnp.float32(1.0 / n)
    return sum_nll[0, 0] * inv_n, sum_correct[0, 0] * inv_n


def fisher_penalty_loss_forward(y_pred, y_true,
                                whether_record_trace=False, fpw=0.0,
                                tile_n=None):
    """JAX/Pallas equivalent of FisherPenaltyLoss.forward (default config).

    Note: for tiny N*C the XLA-fused pure-JAX CE is faster than any kernel
    launch; the Pallas path is intended for realistic batch/class sizes.
    """
    traces = {}
    loss, acc = _ce_acc_pallas(y_pred, y_true, tile_n=tile_n)
    evaluators = {'loss': loss, 'acc': acc}
    # whether_record_trace=False (module default): no Fisher trace term.
    return loss, evaluators, traces


def _reference(y_pred, y_true):
    logp = jax.nn.log_softmax(y_pred.astype(jnp.float32), axis=-1)
    nll = -jnp.take_along_axis(logp, y_true[:, None], axis=-1)[:, 0]
    loss = jnp.mean(nll)
    acc = jnp.mean((jnp.argmax(y_pred, axis=-1) == y_true).astype(jnp.float32))
    return loss, acc


if __name__ == "__main__":
    key = jax.random.PRNGKey(0)
    k1, k2 = jax.random.split(key)

    N, C = 30, 128                    # batch=30 (non-multiple of tile), 128 classes
    y_pred = jax.random.normal(k1, (N, C), dtype=jnp.float32)
    y_true = jax.random.randint(k2, (N,), 0, C, dtype=jnp.int32)

    # tile_n=8 -> 4 grid steps; exercises batch tiling + partial-tile masking
    # (last tile covers rows 24..31, rows 30/31 are masked out in-kernel).
    loss, evaluators, traces = fisher_penalty_loss_forward(y_pred, y_true, tile_n=8)
    loss = jax.block_until_ready(loss)
    acc = jax.block_until_ready(evaluators['acc'])

    ref_loss, ref_acc = _reference(y_pred, y_true)
    assert jnp.allclose(loss, ref_loss, atol=1e-5, rtol=1e-5), (loss, ref_loss)
    assert jnp.allclose(acc, ref_acc, atol=1e-6), (acc, ref_acc)
    assert traces == {}

    # Also exercise the auto-picked tile size path (single big tile here).
    loss2, ev2, _ = fisher_penalty_loss_forward(y_pred, y_true)
    loss2 = jax.block_until_ready(loss2)
    assert jnp.allclose(loss2, ref_loss, atol=1e-5, rtol=1e-5), (loss2, ref_loss)
    assert jnp.allclose(ev2['acc'], ref_acc, atol=1e-6)

    print("KERNEL_OK")
</pallas_src>

<mosaic_0001>
module attributes {stable_mosaic.version = 11 : i64} {
  func.func @_ce_acc_kernel(%arg0: i32, %arg1: memref<8x128xf32, #tpu.memory_space<vmem>>, %arg2: memref<8x1xi32, #tpu.memory_space<vmem>>, %arg3: memref<1x1xf32, #tpu.memory_space<vmem>>, %arg4: memref<1x1xf32, #tpu.memory_space<vmem>>) attributes {dimension_semantics = [#tpu.dimension_semantics<arbitrary>], iteration_bounds = array<i64: 4>, scalar_prefetch = 0 : i64, scratch_operands = 0 : i64, tpu.core_type = #tpu.core_type<tc>, window_params = [{transform_indices = @transform_0, window_bounds = array<i64: 8, 128>}, {transform_indices = @transform_1, window_bounds = array<i64: 8, 1>}, {pipeline_mode = #tpu.pipeline_mode<synchronous>, transform_indices = @transform_2, window_bounds = array<i64: 1, 1>}, {pipeline_mode = #tpu.pipeline_mode<synchronous>, transform_indices = @transform_3, window_bounds = array<i64: 1, 1>}]} {
    %c0_i32 = arith.constant 0 : i32
    %0 = arith.cmpi eq, %arg0, %c0_i32 : i32
    %1 = arith.extui %0 : i1 to i32
    %c0_i32_0 = arith.constant 0 : i32
    %2 = arith.cmpi ne, %1, %c0_i32_0 : i32
    scf.if %2 {
      %cst_21 = arith.constant 0.000000e+00 : f32
      %57 = vector.broadcast %cst_21 : f32 to vector<1x1xf32>
      %c0_22 = arith.constant 0 : index
      %c0_23 = arith.constant 0 : index
      %58 = vector.load %arg3[%c0_22, %c0_23] : memref<1x1xf32, #tpu.memory_space<vmem>>, vector<1x1xf32>
      tpu.vector_store %arg3[%c0_22, %c0_23], %57 {strides = array<i32>} : memref<1x1xf32, #tpu.memory_space<vmem>>, vector<1x1xf32>,
      %cst_24 = arith.constant 0.000000e+00 : f32
      %59 = vector.broadcast %cst_24 : f32 to vector<1x1xf32>
      %c0_25 = arith.constant 0 : index
      %c0_26 = arith.constant 0 : index
      %60 = vector.load %arg4[%c0_25, %c0_26] : memref<1x1xf32, #tpu.memory_space<vmem>>, vector<1x1xf32>
      tpu.vector_store %arg4[%c0_25, %c0_26], %59 {strides = array<i32>} : memref<1x1xf32, #tpu.memory_space<vmem>>, vector<1x1xf32>,
    } else {
    }
    %c0 = arith.constant 0 : index
    %c0_1 = arith.constant 0 : index
    %3 = vector.load %arg1[%c0, %c0_1] : memref<8x128xf32, #tpu.memory_space<vmem>>, vector<8x128xf32>
    %c0_2 = arith.constant 0 : index
    %c0_3 = arith.constant 0 : index
    %4 = vector.load %arg2[%c0_2, %c0_3] : memref<8x1xi32, #tpu.memory_space<vmem>>, vector<8x1xi32>
    %c8_i32 = arith.constant 8 : i32
    %5 = arith.muli %arg0, %c8_i32 : i32
    %6 = tpu.iota {dimensions = array<i32: 0>} : vector<8x1xi32>
    %7 = vector.broadcast %5 : i32 to vector<8x1xi32>
    %8 = arith.addi %7, %6 : vector<8x1xi32>
    %c30_i32 = arith.constant 30 : i32
    %9 = vector.broadcast %c30_i32 : i32 to vector<8x1xi32>
    %10 = arith.cmpi slt, %8, %9 : vector<8x1xi32>
    %11 = tpu.iota {dimensions = array<i32: 1>} : vector<8x128xi32>
    %cst = arith.constant dense<0xFF800000> : vector<8xf32>
    %12 = vector.multi_reduction <maximumf>, %3, %cst [1] : vector<8x128xf32> to vector<8xf32>
    %13 = vector.shape_cast %12 : vector<8xf32> to vector<8x1xf32>
    %14 = vector.broadcast %13 : vector<8x1xf32> to vector<8x128xf32>
    %15 = arith.subf %3, %14 : vector<8x128xf32>
    %16 = math.exp %15 : vector<8x128xf32>
    %cst_4 = arith.constant dense<0.000000e+00> : vector<8xf32>
    %17 = vector.multi_reduction <add>, %16, %cst_4 [1] : vector<8x128xf32> to vector<8xf32>
    %18 = vector.shape_cast %17 : vector<8xf32> to vector<8x1xf32>
    %19 = math.log %18 : vector<8x1xf32>
    %20 = arith.addf %13, %19 : vector<8x1xf32>
    %21 = vector.broadcast %4 : vector<8x1xi32> to vector<8x128xi32>
    %22 = arith.cmpi eq, %11, %21 : vector<8x128xi32>
    %cst_5 = arith.constant 0.000000e+00 : f32
    %23 = vector.broadcast %cst_5 : f32 to vector<8x128xf32>
    %24 = arith.select %22, %3, %23 : vector<8x128xi1>, vector<8x128xf32>
    %cst_6 = arith.constant dense<0.000000e+00> : vector<8xf32>
    %25 = vector.multi_reduction <add>, %24, %cst_6 [1] : vector<8x128xf32> to vector<8xf32>
    %26 = vector.shape_cast %25 : vector<8xf32> to vector<8x1xf32>
    %27 = arith.subf %20, %26 : vector<8x1xf32>
    %28 = vector.broadcast %13 : vector<8x1xf32> to vector<8x128xf32>
    %29 = arith.cmpf oeq, %3, %28 : vector<8x128xf32>
    %c128_i32 = arith.constant 128 : i32
    %30 = vector.broadcast %c128_i32 : i32 to vector<8x128xi32>
    %31 = arith.select %29, %11, %30 : vector<8x128xi1>, vector<8x128xi32>
    %cst_7 = arith.constant dense<2147483647> : vector<8xi32>
    %32 = vector.multi_reduction <minsi>, %31, %cst_7 [1] : vector<8x128xi32> to vector<8xi32>
    %33 = vector.shape_cast %32 : vector<8xi32> to vector<8x1xi32>
    %34 = arith.cmpi eq, %33, %4 : vector<8x1xi32>
    %c0_8 = arith.constant 0 : index
    %c0_9 = arith.constant 0 : index
    %35 = vector.load %arg3[%c0_8, %c0_9] : memref<1x1xf32, #tpu.memory_space<vmem>>, vector<1x1xf32>
    %cst_10 = arith.constant 0.000000e+00 : f32
    %36 = vector.broadcast %cst_10 : f32 to vector<8x1xf32>
    %37 = arith.select %10, %27, %36 : vector<8x1xi1>, vector<8x1xf32>
    %38 = vector.shape_cast %37 : vector<8x1xf32> to vector<1x8x1xf32>
    %cst_11 = arith.constant dense<0.000000e+00> : vector<1xf32>
    %39 = vector.multi_reduction <add>, %38, %cst_11 [1, 2] : vector<1x8x1xf32> to vector<1xf32>
    %40 = vector.shape_cast %39 : vector<1xf32> to vector<1x1x1xf32>
    %41 = vector.extract %40[0, 0, 0] : f32 from vector<1x1x1xf32>
    %42 = vector.broadcast %41 : f32 to vector<1x1xf32>
    %43 = arith.addf %35, %42 : vector<1x1xf32>
    %c0_12 = arith.constant 0 : index
    %c0_13 = arith.constant 0 : index
    %44 = vector.load %arg3[%c0_12, %c0_13] : memref<1x1xf32, #tpu.memory_space<vmem>>, vector<1x1xf32>
    tpu.vector_store %arg3[%c0_12, %c0_13], %43 {strides = array<i32>} : memref<1x1xf32, #tpu.memory_space<vmem>>, vector<1x1xf32>,
    %c0_14 = arith.constant 0 : index
    %c0_15 = arith.constant 0 : index
    %45 = vector.load %arg4[%c0_14, %c0_15] : memref<1x1xf32, #tpu.memory_space<vmem>>, vector<1x1xf32>
    %46 = arith.andi %10, %34 : vector<8x1xi1>
    %cst_16 = arith.constant 1.000000e+00 : f32
    %cst_17 = arith.constant 0.000000e+00 : f32
    %47 = vector.broadcast %cst_16 : f32 to vector<8x1xf32>
    %48 = vector.broadcast %cst_17 : f32 to vector<8x1xf32>
    %49 = arith.select %46, %47, %48 : vector<8x1xi1>, vector<8x1xf32>
    %50 = vector.shape_cast %49 : vector<8x1xf32> to vector<1x8x1xf32>
    %cst_18 = arith.constant dense<0.000000e+00> : vector<1xf32>
    %51 = vector.multi_reduction <add>, %50, %cst_18 [1, 2] : vector<1x8x1xf32> to vector<1xf32>
    %52 = vector.shape_cast %51 : vector<1xf32> to vector<1x1x1xf32>
    %53 = vector.extract %52[0, 0, 0] : f32 from vector<1x1x1xf32>
    %54 = vector.broadcast %53 : f32 to vector<1x1xf32>
    %55 = arith.addf %45, %54 : vector<1x1xf32>
    %c0_19 = arith.constant 0 : index
    %c0_20 = arith.constant 0 : index
    %56 = vector.load %arg4[%c0_19, %c0_20] : memref<1x1xf32, #tpu.memory_space<vmem>>, vector<1x1xf32>
    tpu.vector_store %arg4[%c0_19, %c0_20], %55 {strides = array<i32>} : memref<1x1xf32, #tpu.memory_space<vmem>>, vector<1x1xf32>,
    return
  }
  func.func @transform_0(%arg0: i32) -> (i32, i32) {
    %c0_i32 = arith.constant 0 : i32
    %c0_i32_0 = arith.constant 0 : i32
    return %arg0, %c0_i32 : i32, i32
  }
  func.func @transform_1(%arg0: i32) -> (i32, i32) {
    %c0_i32 = arith.constant 0 : i32
    %c0_i32_0 = arith.constant 0 : i32
    return %arg0, %c0_i32 : i32, i32
  }
  func.func @transform_2(%arg0: i32) -> (i32, i32) {
    %c0_i32 = arith.constant 0 : i32
    %c0_i32_0 = arith.constant 0 : i32
    %c0_i32_1 = arith.constant 0 : i32
    return %c0_i32, %c0_i32_0 : i32, i32
  }
  func.func @transform_3(%arg0: i32) -> (i32, i32) {
    %c0_i32 = arith.constant 0 : i32
    %c0_i32_0 = arith.constant 0 : i32
    %c0_i32_1 = arith.constant 0 : i32
    return %c0_i32, %c0_i32_0 : i32, i32
  }
}

</mosaic_0001>

<llo_original>
// kernel: tpu_custom_call.1
$region0: #{tpu_custom_call.1}
  #allocation0 [shape = 'u32[]', space=smem, size = 0x4, offset = 0x4, fixed_abs, tag = 'smem constant byte address 0x4 - core index']
  #allocation1 [shape = 'u32[144,128]{1,0:T(1,128)}', space=vmem, size = 0x12000, scoped, tag = 'internal scratch']
  %s0 = inlined_call_operand.vmem [shape: f32[30,128], index: 0, kind: input, shape index: {}]
  %s1 = inlined_call_operand.vmem [shape: s32[30,1], index: 1, kind: input, shape index: {}]
  %s2 = inlined_call_operand.hbm [shape: f32[1,1], index: 2, kind: output, shape index: {0}]
  %s3 = inlined_call_operand.hbm [shape: f32[1,1], index: 3, kind: output, shape index: {1}]
  %4 = xla_tuple %s2, %s3
  %s5 = sld [smem:[#allocation0]]
  $region53: #{tpu_custom_call.1} parent=0
    _
  %s7 = ssub.s32 1, %s5
  %s8 = scalar_select 0, %s7, %s5
  $region1: #{tpu_custom_call.1} parent=0
    #allocation2 [shape = 'u8[512]{0}', space=vmem, size = 0x400, scoped, tag = 'output window, operand 0, single buffered']
    #allocation3 [shape = 's32[2]{0}', space=sflag, size = 0x8, scoped, tag = 'scoped memory for tpu_custom_call.1']
    #allocation4 [shape = 'u8[512]{0}', space=vmem, size = 0x400, scoped, tag = 'output window, operand 1, single buffered']
    #allocation5 [shape = 's32[1]{0}', space=sflag, size = 0x4, scoped, tag = 'scoped memory for tpu_custom_call.1']
    %9 = vsyncpa [#allocation3], 0
    %10 = vsyncpa [#allocation5], 0
    loop: start=0, step=1, limit=6
    $region2: #{tpu_custom_call.1} parent=1 // loop_pre_header
      _
    $region3: #{tpu_custom_call.1} parent=1 // loop_header
      %s12 = sphi 0, %s16
      %p13 = scmp.ge.s32.totalorder %s12, 6
      %s22 = sphi 0, %s24
      %s25 = sphi 0, %s22
      %s26 = sphi 0, %s25
      %s42 = sphi 0, %s26
      %s48 = sphi 0, %s50
      %s51 = sphi 0, %s48
      %s52 = sphi 0, %s51
      %s68 = sphi 0, %s52
      %s72 = sphi 0, %s72
      %s74 = sphi 0, %s72
      %s75 = sphi 0, %s74
      %s89 = sphi 0, %s75
      %s93 = sphi 0, %s93
      %s95 = sphi 0, %s93
      %s96 = sphi 0, %s95
      %s110 = sphi 0, %s96
    $region4: #{tpu_custom_call.1} parent=1 // loop_header_branch
      %15 = sbr.rel (%p13) target = $region8
    $region5: #{tpu_custom_call.1} parent=1 // loop_body
      %s17 = ssub.s32 %s12, 1
      %s18 = ssub.s32 %s12, 2
      %s19 = sadd.s32 %s12, 1
      %s20 = ssub.s32 %s12, %s19
      %p21 = scmp.eq.s32.totalorder %s20, 0
      %s23 = sadd.s32 %s22, 1
      %s24 = scalar_select %p21, %s22, %s23
      %p27 = pneg %p21
      %p28 = scmp.eq.s32.totalorder %s12, 3
      %p29 = por %p27, %p28
      %p30 = scmp.ne.s32.totalorder %s22, %s25
      %p31 = scmp.eq.s32.totalorder %s12, 0
      %p32 = por %p30, %p31
      %p33 = scmp.ne.s32.totalorder %s22, %s25
      %p34 = scmp.eq.s32.totalorder %s17, 3
      %p35 = por %p33, %p34
      %p36 = scmp.ne.s32.totalorder %s25, %s26
      %p37 = scmp.eq.s32.totalorder %s17, 0
      %p38 = por %p36, %p37
      %p39 = scmp.ne.s32.totalorder %s25, %s26
      %p40 = scmp.eq.s32.totalorder %s18, 3
      %p41 = por %p39, %p40
      %p43 = scmp.ne.s32.totalorder %s26, %s42
      %p44 = scmp.eq.s32.totalorder %s18, 0
      %p45 = por %p43, %p44
      %s46 = ssub.s32 %s12, %s19
      %p47 = scmp.eq.s32.totalorder %s46, 0
      %s49 = sadd.s32 %s48, 1
      %s50 = scalar_select %p47, %s48, %s49
      %p53 = pneg %p47
      %p54 = scmp.eq.s32.totalorder %s12, 3
      %p55 = por %p53, %p54
      %p56 = scmp.ne.s32.totalorder %s48, %s51
      %p57 = scmp.eq.s32.totalorder %s12, 0
      %p58 = por %p56, %p57
      %p59 = scmp.ne.s32.totalorder %s48, %s51
      %p60 = scmp.eq.s32.totalorder %s17, 3
      %p61 = por %p59, %p60
      %p62 = scmp.ne.s32.totalorder %s51, %s52
      %p63 = scmp.eq.s32.totalorder %s17, 0
      %p64 = por %p62, %p63
      %p65 = scmp.ne.s32.totalorder %s51, %s52
      %p66 = scmp.eq.s32.totalorder %s18, 3
      %p67 = por %p65, %p66
      %p69 = scmp.ne.s32.totalorder %s52, %s68
      %p70 = scmp.eq.s32.totalorder %s18, 0
      %p71 = por %p69, %p70
      %s73 = sadd.s32 %s72, 1
      %p76 = scmp.eq.s32.totalorder %s12, 3
      %p77 = scmp.ne.s32.totalorder %s72, %s74
      %p78 = scmp.eq.s32.totalorder %s12, 0
      %p79 = por %p77, %p78
      %p80 = scmp.ne.s32.totalorder %s72, %s74
      %p81 = scmp.eq.s32.totalorder %s17, 3
      %p82 = por %p80, %p81
      %p83 = scmp.ne.s32.totalorder %s74, %s75
      %p84 = scmp.eq.s32.totalorder %s17, 0
      %p85 = por %p83, %p84
      %p86 = scmp.ne.s32.totalorder %s74, %s75
      %p87 = scmp.eq.s32.totalorder %s18, 3
      %p88 = por %p86, %p87
      %p90 = scmp.ne.s32.totalorder %s75, %s89
      %p91 = scmp.eq.s32.totalorder %s18, 0
      %p92 = por %p90, %p91
      %s94 = sadd.s32 %s93, 1
      %p97 = scmp.eq.s32.totalorder %s12, 3
      %p98 = scmp.ne.s32.totalorder %s93, %s95
      %p99 = scmp.eq.s32.totalorder %s12, 0
      %p100 = por %p98, %p99
      %p101 = scmp.ne.s32.totalorder %s93, %s95
      %p102 = scmp.eq.s32.totalorder %s17, 3
      %p103 = por %p101, %p102
      %p104 = scmp.ne.s32.totalorder %s95, %s96
      %p105 = scmp.eq.s32.totalorder %s17, 0
      %p106 = por %p104, %p105
      %p107 = scmp.ne.s32.totalorder %s95, %s96
      %p108 = scmp.eq.s32.totalorder %s18, 3
      %p109 = por %p107, %p108
      %p111 = scmp.ne.s32.totalorder %s96, %s110
      %p112 = scmp.eq.s32.totalorder %s18, 0
      %p113 = por %p111, %p112
      %p114 = scmp.le.s32.totalorder 1, %s12
      %p115 = scmp.lt.s32.totalorder %s12, 5
      %p116 = pnand %p114, %p115
      %p117 = pneg %p116
      // Predicated region
      $region9: #{tpu_custom_call.1} parent=5 // pred_check
        _
      $region10: #{tpu_custom_call.1} parent=5 // pred_check_branch
        %119 = sbr.rel (%p116) target = $region12
      $region11: #{tpu_custom_call.1} parent=5 // pred_region
        %s120 = ssub.s32 %s12, 1
      $region12: #{tpu_custom_call.1} parent=5 // pred_fallthru
        _
      %p121 = scmp.lt.s32.totalorder %s12, 4
      // Predicated region
      $region13: #{tpu_custom_call.1} parent=5 // pred_check
        %p122 = pneg %p121
      $region14: #{tpu_custom_call.1} parent=5 // pred_check_branch
        %124 = sbr.rel (%p122) target = $region16
      $region15: #{tpu_custom_call.1} parent=5 // pred_region
        // Predicated region
        $region17: #{tpu_custom_call.1} parent=15 // pred_check
          %p125 = pneg %p32
        $region18: #{tpu_custom_call.1} parent=15 // pred_check_branch
          %127 = sbr.rel (%p125) target = $region20
        $region19: #{tpu_custom_call.1} parent=15 // pred_region
          %p128 = scmp.lt.s32.totalorder %s12, 3
          %s129 = scalar_select %p128, %s12, 3
          %s130 = smul.addr %s129, 8
          %s131 = scalar_lea.vmem %s0, %s130
        $region20: #{tpu_custom_call.1} parent=15 // pred_fallthru
          _
        // Predicated region
        $region21: #{tpu_custom_call.1} parent=15 // pred_check
          %p132 = pneg %p58
        $region22: #{tpu_custom_call.1} parent=15 // pred_check_branch
          %134 = sbr.rel (%p132) target = $region24
        $region23: #{tpu_custom_call.1} parent=15 // pred_region
          %p135 = scmp.lt.s32.totalorder %s12, 3
          %s136 = scalar_select %p135, %s12, 3
          %s137 = smul.addr %s136, 8
          %s138 = scalar_lea.vmem %s1, %s137
        $region24: #{tpu_custom_call.1} parent=15 // pred_fallthru
          _
      $region16: #{tpu_custom_call.1} parent=5 // pred_fallthru
        _
      %p139 = scmp.le.s32.totalorder 1, %s12
      %p140 = scmp.lt.s32.totalorder %s12, 5
      %p141 = pnand %p139, %p140
      %p142 = pneg %p141
      // Predicated region
      $region25: #{tpu_custom_call.1} parent=5 // pred_check
        _
      $region26: #{tpu_custom_call.1} parent=5 // pred_check_branch
        %144 = sbr.rel (%p141) target = $region28
      $region27: #{tpu_custom_call.1} parent=5 // pred_region
        %s145 = ssub.s32 %s12, 1
        %p146 = scmp.lt.s32.totalorder %s17, 3
        %s147 = scalar_select %p146, %s17, 3
        %s148 = smul.addr %s147, 8
        %s149 = scalar_lea.vmem %s0, %s148
        %p150 = pneg %p38
        %p151 = pneg %p35
        %p152 = scmp.lt.s32.totalorder %s17, 3
        %s153 = scalar_select %p152, %s17, 3
        %s154 = smul.addr %s153, 8
        %s155 = scalar_lea.vmem %s1, %s154
        %p156 = pneg %p64
        %p157 = pneg %p61
        %p158 = pneg %p85
        %p159 = pneg %p82
        %p160 = pneg %p106
        %p161 = pneg %p103
        %p162 = scmp.lt.s32.totalorder %s17, 3
        %s163 = scalar_select %p162, %s17, 3
        %s164 = smul.addr %s163, 8
        %s165 = scalar_lea.vmem %s0, %s164
        %p166 = scmp.lt.s32.totalorder %s17, 3
        %s167 = scalar_select %p166, %s17, 3
        %s168 = smul.addr %s167, 8
        %s169 = scalar_lea.vmem %s1, %s168
        %p170 = scmp.eq.s32.totalorder %s17, 0
        // Predicated region
        $region29: #{tpu_custom_call.1} parent=27 // pred_check
          %p171 = pneg %p170
        $region30: #{tpu_custom_call.1} parent=27 // pred_check_branch
          %173 = sbr.rel (%p171) target = $region32
        $region31: #{tpu_custom_call.1} parent=27 // pred_region
          %vm174 = vcmask 0
          %175 = vst.msk [vmem:[#allocation2] sm:$0x1] %vm174, 0.0
          %176 = vst.msk [vmem:[#allocation4] sm:$0x1] %vm174, 0.0
        $region32: #{tpu_custom_call.1} parent=27 // pred_fallthru
          _
        %v177 = vld [vmem:[%s165] sm:$0xff]
        %v178 = vld [vmem:[%s169] sm:$0xff]
        %s179 = smul.u32 %s17, 8
        %v180 = vlaneseq
        %v181 = vshrl.u32 %v180, 7
        %v182 = vstv %s179
        %v183 = vadd.s32 %v182, %v181
        %vm184 = vcmp.lt.s32.totalorder %v183, 30
        %v185 = vlaneseq
        %v186 = vand.u32 %v185, 127
        %187 = vmax.xlane.f32.xlu0 %v177
        %v188 = vpop.xlane.xlu0 %187
        %v189 = vsub.f32 %v177, %v188
        %v190 = vmul.f32 %v189, 1.442695
        %v191 = vpow.pop %v190
        %192 = vadd.xlane.f32.xlu0 %v191
        %v193 = vpop.xlane.xlu0 %192
        %v194 = vlog2.pop %v193
        %v195 = vmul.f32 %v194, 0.6931472
        %v196 = vadd.f32 %v188, %v195
        %197 = vset.pattern.permute.xlu0 0
        %198 = vperm.xlu0 %197, %v178
        %v199 = vpop.permute.xlu0 %198
        %vm200 = vcmp.eq.s32.totalorder %v186, %v199
        %v201 = vsel %vm200, %v177, 0.0
        %202 = vadd.xlane.f32.xlu0 %v201
        %v203 = vpop.xlane.xlu0 %202
        %v204 = vsub.f32 %v196, %v203
        %vm205 = vcmp.eq.f32.partialorder %v177, %v188
        %v206 = vsel %vm205, %v186, 128
        %v207 = vand.u32 %v206, 65535
        %v208 = vshra.s32 %v206, 16
        %v209 = vcvt.s32.f32 %v207
        %v210 = vcvt.s32.f32 %v208
        %211 = vmin.xlane.f32.xlu0 %v210
        %v212 = vpop.xlane.xlu0 %211
        %vm213 = vcmp.eq.f32.partialorder %v210, %v212
        %v214 = vsel %vm213, %v209, inf
        %215 = vmin.xlane.f32.xlu0 %v214
        %v216 = vpop.xlane.xlu0 %215
        %v217 = vcvt.f32.s32 %v216
        %v218 = vcvt.f32.s32 %v212
        %v219 = vshll.u32 %v218, 16
        %v220 = vadd.s32 %v219, %v217
        %vm221 = vcmp.eq.s32.totalorder %v220, %v178
        %v222 = vld [vmem:[#allocation2] sm:$0x1]
        %v223 = vsel %vm184, %v204, 0.0
        %vm224 = vcmask 7168
        %v225 = vsel %vm224, %v223, 0.0
        %226 = vadd.xlane.f32.xlu0 %v225
        %v227 = vpop.xlane.xlu0 %226
        %v228 = vrot.slane %v227, 4
        %v229 = vadd.f32 %v227, %v228
        %v230 = vrot.slane %v229, 2
        %v231 = vadd.f32 %v229, %v230
        %v232 = vrot.slane %v231, 1
        %v233 = vadd.f32 %v231, %v232
        %s234 = vtos %v233
        %v235 = vstv %s234
        %v236 = vadd.f32 %v222, %v235
        %vm237 = vcmask 0
        %238 = vst.msk [vmem:[#allocation2] sm:$0x1] %vm237, %v236
        %v239 = vld [vmem:[#allocation4] sm:$0x1]
        %vm240 = vmand %vm184, %vm221
        %v241 = vsel %vm240, 1.0, 0.0
        %v242 = vsel %vm224, %v241, 0.0
        %243 = vadd.xlane.f32.xlu0 %v242
        %v244 = vpop.xlane.xlu0 %243
        %v245 = vrot.slane %v244, 4
        %v246 = vadd.f32 %v244, %v245
        %v247 = vrot.slane %v246, 2
        %v248 = vadd.f32 %v246, %v247
        %v249 = vrot.slane %v248, 1
        %v250 = vadd.f32 %v248, %v249
        %s251 = vtos %v250
        %v252 = vstv %s251
        %v253 = vadd.f32 %v239, %v252
        %254 = vst.msk [vmem:[#allocation4] sm:$0x1] %vm237, %v253
        // Predicated region
        $region33: #{tpu_custom_call.1} parent=27 // pred_check
          %p255 = pneg %p82
        $region34: #{tpu_custom_call.1} parent=27 // pred_check_branch
          %257 = sbr.rel (%p255) target = $region36
        $region35: #{tpu_custom_call.1} parent=27 // pred_region
          %s259 = ssub.s32 16, 16
          %260 = vsyncadd [#allocation3], %s259
          %s262 = sshll.u32 [#allocation2], 4
          %s263 = int_to_ptr.vmem [resolvable:$true] %s262
          %265 = dma.vmem_to_hbm [thread:$0]  %s263, 16, %s2, [#allocation3]
        $region36: #{tpu_custom_call.1} parent=27 // pred_fallthru
          _
        // Predicated region
        $region37: #{tpu_custom_call.1} parent=27 // pred_check
          %p266 = pneg %p103
        $region38: #{tpu_custom_call.1} parent=27 // pred_check_branch
          %268 = sbr.rel (%p266) target = $region40
        $region39: #{tpu_custom_call.1} parent=27 // pred_region
          %s270 = ssub.s32 16, 16
          %271 = vsyncadd [#allocation5], %s270
          %s273 = sshll.u32 [#allocation4], 4
          %s274 = int_to_ptr.vmem [resolvable:$true] %s273
          %276 = dma.vmem_to_hbm [thread:$0]  %s274, 16, %s3, [#allocation5]
        $region40: #{tpu_custom_call.1} parent=27 // pred_fallthru
          _
        // Predicated region
        $region41: #{tpu_custom_call.1} parent=27 // pred_check
          %p277 = pneg %p82
        $region42: #{tpu_custom_call.1} parent=27 // pred_check_branch
          %279 = sbr.rel (%p277) target = $region44
        $region43: #{tpu_custom_call.1} parent=27 // pred_region
          %280 = dma.done [#allocation3], 16
        $region44: #{tpu_custom_call.1} parent=27 // pred_fallthru
          _
        // Predicated region
        $region45: #{tpu_custom_call.1} parent=27 // pred_check
          %p281 = pneg %p103
        $region46: #{tpu_custom_call.1} parent=27 // pred_check_branch
          %283 = sbr.rel (%p281) target = $region48
        $region47: #{tpu_custom_call.1} parent=27 // pred_region
          %284 = dma.done [#allocation5], 16
        $region48: #{tpu_custom_call.1} parent=27 // pred_fallthru
          _
      $region28: #{tpu_custom_call.1} parent=5 // pred_fallthru
        _
      %p285 = scmp.le.s32.totalorder 2, %s12
      // Predicated region
      $region49: #{tpu_custom_call.1} parent=5 // pred_check
        %p286 = pneg %p285
      $region50: #{tpu_custom_call.1} parent=5 // pred_check_branch
        %288 = sbr.rel (%p286) target = $region52
      $region51: #{tpu_custom_call.1} parent=5 // pred_region
        %s289 = ssub.s32 %s12, 2
      $region52: #{tpu_custom_call.1} parent=5 // pred_fallthru
        _
    $region6: #{tpu_custom_call.1} parent=1 // loop_footer
      %s16 = sadd.s32 1, %s12
    $region7: #{tpu_custom_call.1} parent=1 // loop_footer_branch
      %11 = sbr.rel target = $region3
    $region8: #{tpu_custom_call.1} parent=1 // loop_exit
      _
    %290 = vsyncpa [#allocation3], 1
    %s291 = scalar_lea.sflag [#allocation3], 1
    %292 = vsyncpa %s291, 1
    %293 = vsyncpa [#allocation5], 1

</llo_original>
